<compile_context>
chip_gen: v7x
topology: tpu7x:2x2x1
jax: 0.10.0
libtpu: 0.0.40
codegen_flags: <defaults>
</compile_context>

<pallas_src>
import math

import jax
import jax.numpy as jnp
from jax.experimental import pallas as pl
from jax.experimental.pallas import tpu as pltpu


# ----------------------------------------------------------------------------
# Pallas kernel: fused SCIRD filter construction + conv-as-matmul
# ----------------------------------------------------------------------------

def _scird_conv_kernel(par_ref, gdx_ref, gdy_ref, col_ref, o_ref):
    """par_ref: SMEM (5,) f32  [ratio, 1/(2*gamma^2), 1/(2*sigma^2), 1/sigma^2, 1/sigma^4]
       gdx_ref, gdy_ref: VMEM (C, K)  rotated tap grids (C=12 channels, K=ksize^2 taps)
       col_ref: VMEM (1, K, Mt)       im2col'd input tile (taps on sublanes, pixels on lanes)
       o_ref:   VMEM (1, C, Mt)       output tile, channels on sublanes / pixels on lanes (NCHW)
    """
    ratio = par_ref[0]
    inv_2g2 = par_ref[1]
    inv_2s2 = par_ref[2]
    inv_s2 = par_ref[3]
    inv_s4 = par_ref[4]

    # Filter bank (make_kernels fused in): exp(-gdx^2/(2g^2) - t/(2s^2)) * (t/s^4 - 1/s^2)
    # with t = (gdy + ratio*gdx^2)^2.  C*K = 12*121 elements -> VPU/EUP, essentially free.
    gdx = gdx_ref[...]
    gdy = gdy_ref[...]
    gdx2 = gdx * gdx
    t = gdy + ratio * gdx2
    t = t * t
    w = jnp.exp(-gdx2 * inv_2g2 - t * inv_2s2) * (t * inv_s4 - inv_s2)

    # (C, K) @ (K, Mt) on the MXU: spatial pixels on output lanes -> unmasked, lane-dense
    # stores; the output block is already in NCHW channel-major layout.
    o_ref[0] = jnp.dot(w, col_ref[0], preferred_element_type=jnp.float32)


# ----------------------------------------------------------------------------
# Parameter preprocessing / buffers (glue)
# ----------------------------------------------------------------------------

def _rotated_grids(ksize, channels):
    """Replicates the registered gdx_i / gdy_i buffers, flattened to (channels, ksize^2)."""
    half = ksize // 2
    idx = jnp.arange(ksize, dtype=jnp.float32) - half
    gu, gv = jnp.meshgrid(idx, idx, indexing='ij')        # gu = torch "gridx", gv = "gridy"
    thetas = (math.pi / channels) * jnp.arange(channels, dtype=jnp.float32)
    cos = jnp.cos(thetas)[:, None, None]
    sin = jnp.sin(thetas)[:, None, None]
    gdx = gu[None] * cos + gv[None] * sin
    gdy = gv[None] * cos - gu[None] * sin
    k2 = ksize * ksize
    return (gdx.reshape(channels, k2).astype(jnp.float32),
            gdy.reshape(channels, k2).astype(jnp.float32))


def _derived_scalars(sigma_p, gamma_p, ratio_p):
    """1.5+tanh / 0.3*tanh reparameterisation, pre-inverted so the kernel is mul/add only."""
    gamma = 1.5 + jnp.tanh(gamma_p[0])
    sigma = 1.5 + jnp.tanh(sigma_p[0])
    ratio = 0.3 * jnp.tanh(ratio_p[0])
    s2 = sigma * sigma
    g2 = gamma * gamma
    return jnp.stack([ratio, 0.5 / g2, 0.5 / s2, 1.0 / s2, 1.0 / (s2 * s2)]).astype(jnp.float32)


def _filters(par, gdx, gdy):
    """Plain-JAX replica of the in-kernel filter math (used only for the reference check)."""
    ratio, inv_2g2, inv_2s2, inv_s2, inv_s4 = (par[i] for i in range(5))
    gdx2 = gdx * gdx
    t = gdy + ratio * gdx2
    t = t * t
    return jnp.exp(-gdx2 * inv_2g2 - t * inv_2s2) * (t * inv_s4 - inv_s2)


# ----------------------------------------------------------------------------
# Forward
# ----------------------------------------------------------------------------

def scird_forward(par, gdx, gdy, x, *, ksize, pad):
    """x: (N, 1, H, W) float32  ->  (N, 12, H, W) float32 (cross-correlation, 'same')."""
    x = x.astype(jnp.float32)
    N, cin, H, W = x.shape
    if cin != 1:
        raise ValueError("MatchSCIRD expects a single input channel")
    C = gdx.shape[0]
    K = ksize * ksize
    Ho, Wo = H, W
    M = Ho * Wo

    # im2col (glue): (N, K, M) with taps on sublanes, flattened pixels on lanes.
    xp = jnp.pad(x[:, 0], ((0, 0), (pad, pad), (pad, pad)))
    taps = [xp[:, u:u + Ho, v:v + Wo] for u in range(ksize) for v in range(ksize)]
    colT = jnp.stack(taps, axis=1).reshape(N, K, M)

    # Lane-dense M tiling: pad M up to a multiple of 128, tile at <= 512 lanes.
    m128 = ((M + 127) // 128) * 128
    Mt = m128 if m128 <= 512 else 512
    Mpad = ((M + Mt - 1) // Mt) * Mt
    if Mpad != M:
        colT = jnp.pad(colT, ((0, 0), (0, 0), (0, Mpad - M)))

    out = pl.pallas_call(
        _scird_conv_kernel,
        out_shape=jax.ShapeDtypeStruct((N, C, Mpad), jnp.float32),
        grid=(N, Mpad // Mt),
        in_specs=[
            pl.BlockSpec(memory_space=pltpu.MemorySpace.SMEM),     # 5 scalars
            pl.BlockSpec((C, K), lambda n, m: (0, 0)),             # gdx (resident)
            pl.BlockSpec((C, K), lambda n, m: (0, 0)),             # gdy (resident)
            pl.BlockSpec((1, K, Mt), lambda n, m: (n, 0, m)),      # im2col tile
        ],
        out_specs=pl.BlockSpec((1, C, Mt), lambda n, m: (n, 0, m)),
        compiler_params=pltpu.CompilerParams(
            dimension_semantics=("parallel", "parallel"),
            vmem_limit_bytes=32 * 1024 * 1024,
        ),
    )(par, gdx, gdy, colT)

    return out[:, :, :M].reshape(N, C, Ho, Wo)


class MatchSCIRD:
    """Pallas/JAX port of nets.mfu.MatchSCIRD (forward only)."""
    channels = 12

    def __init__(self, key, sigma=5):
        self.pad = sigma
        self.ksize = 2 * sigma + 1
        ks, kg, kr = jax.random.split(key, 3)
        # learnable scalars (torch.randn(1) equivalents)
        self.sigma = jax.random.normal(ks, (1,), jnp.float32)
        self.gamma = jax.random.normal(kg, (1,), jnp.float32)
        self.ratio = jax.random.normal(kr, (1,), jnp.float32)
        # fixed rotated-grid buffers, flattened taps: (channels, ksize^2)
        self.gdx, self.gdy = _rotated_grids(self.ksize, self.channels)
        # TODO(synk): plot()/regular() utilities of the reference module are not ported
        # (they do not affect the forward output).

    def __call__(self, x):
        par = _derived_scalars(self.sigma, self.gamma, self.ratio)
        return scird_forward(par, self.gdx, self.gdy, x, ksize=self.ksize, pad=self.pad)


# ----------------------------------------------------------------------------

if __name__ == "__main__":
    root = jax.random.PRNGKey(0)
    kparam, kx = jax.random.split(root)
    model = MatchSCIRD(kparam, sigma=5)

    x = jax.random.uniform(kx, (2, 1, 16, 16), dtype=jnp.float32)

    fwd = jax.jit(lambda xin: model(xin))
    y = jax.block_until_ready(fwd(x))

    assert y.shape == (2, MatchSCIRD.channels, 16, 16), y.shape
    assert bool(jnp.all(jnp.isfinite(y)))

    # Correctness check against a plain-XLA conv reference (same filters, same padding).
    par = _derived_scalars(model.sigma, model.gamma, model.ratio)
    w = _filters(par, model.gdx, model.gdy).reshape(
        MatchSCIRD.channels, 1, model.ksize, model.ksize)
    ref = jax.lax.conv_general_dilated(
        x, w, window_strides=(1, 1),
        padding=((model.pad, model.pad), (model.pad, model.pad)),
        dimension_numbers=('NCHW', 'OIHW', 'NCHW'),
        precision=jax.lax.Precision.HIGHEST)
    err = float(jnp.max(jnp.abs(y - ref)))
    scale = float(jnp.max(jnp.abs(ref))) + 1e-6
    assert err <= 5e-2 * scale + 5e-2, ("mismatch vs reference", err, scale)

    print("KERNEL_OK")
</pallas_src>

<mosaic_0001>
module attributes {stable_mosaic.version = 11 : i64} {
  func.func @_scird_conv_kernel(%arg0: i32, %arg1: i32, %arg2: memref<5xf32, #tpu.memory_space<smem>>, %arg3: memref<12x121xf32, #tpu.memory_space<vmem>>, %arg4: memref<12x121xf32, #tpu.memory_space<vmem>>, %arg5: memref<1x121x256xf32, #tpu.memory_space<vmem>>, %arg6: memref<1x12x256xf32, #tpu.memory_space<vmem>>) attributes {dimension_semantics = [#tpu.dimension_semantics<parallel>, #tpu.dimension_semantics<parallel>], iteration_bounds = array<i64: 2, 1>, scalar_prefetch = 0 : i64, scratch_operands = 0 : i64, tpu.core_type = #tpu.core_type<tc>, window_params = [{transform_indices = @transform_0, window_bounds = array<i64: 5>}, {pipeline_mode = #tpu.pipeline_mode<synchronous>, transform_indices = @transform_1, window_bounds = array<i64: 12, 121>}, {pipeline_mode = #tpu.pipeline_mode<synchronous>, transform_indices = @transform_2, window_bounds = array<i64: 12, 121>}, {transform_indices = @transform_3, window_bounds = array<i64: 1, 121, 256>}, {transform_indices = @transform_4, window_bounds = array<i64: 1, 12, 256>}]} {
    %c0 = arith.constant 0 : index
    %0 = memref.load %arg2[%c0] : memref<5xf32, #tpu.memory_space<smem>>
    %c1 = arith.constant 1 : index
    %1 = memref.load %arg2[%c1] : memref<5xf32, #tpu.memory_space<smem>>
    %c2 = arith.constant 2 : index
    %2 = memref.load %arg2[%c2] : memref<5xf32, #tpu.memory_space<smem>>
    %c3 = arith.constant 3 : index
    %3 = memref.load %arg2[%c3] : memref<5xf32, #tpu.memory_space<smem>>
    %c4 = arith.constant 4 : index
    %4 = memref.load %arg2[%c4] : memref<5xf32, #tpu.memory_space<smem>>
    %c0_0 = arith.constant 0 : index
    %c0_1 = arith.constant 0 : index
    %5 = vector.load %arg3[%c0_0, %c0_1] : memref<12x121xf32, #tpu.memory_space<vmem>>, vector<12x121xf32>
    %c0_2 = arith.constant 0 : index
    %c0_3 = arith.constant 0 : index
    %6 = vector.load %arg4[%c0_2, %c0_3] : memref<12x121xf32, #tpu.memory_space<vmem>>, vector<12x121xf32>
    %7 = arith.mulf %5, %5 : vector<12x121xf32>
    %8 = vector.broadcast %0 : f32 to vector<12x121xf32>
    %9 = arith.mulf %8, %7 : vector<12x121xf32>
    %10 = arith.addf %6, %9 : vector<12x121xf32>
    %11 = arith.mulf %10, %10 : vector<12x121xf32>
    %cst = arith.constant 0.000000e+00 : f32
    %12 = vector.broadcast %cst : f32 to vector<12x121xf32>
    %13 = arith.subf %12, %7 : vector<12x121xf32>
    %14 = vector.broadcast %1 : f32 to vector<12x121xf32>
    %15 = arith.mulf %13, %14 : vector<12x121xf32>
    %16 = vector.broadcast %2 : f32 to vector<12x121xf32>
    %17 = arith.mulf %11, %16 : vector<12x121xf32>
    %18 = arith.subf %15, %17 : vector<12x121xf32>
    %19 = math.exp %18 : vector<12x121xf32>
    %20 = vector.broadcast %4 : f32 to vector<12x121xf32>
    %21 = arith.mulf %11, %20 : vector<12x121xf32>
    %22 = vector.broadcast %3 : f32 to vector<12x121xf32>
    %23 = arith.subf %21, %22 : vector<12x121xf32>
    %24 = arith.mulf %19, %23 : vector<12x121xf32>
    %c0_4 = arith.constant 0 : index
    %c0_5 = arith.constant 0 : index
    %c0_6 = arith.constant 0 : index
    %25 = vector.load %arg5[%c0_4, %c0_5, %c0_6] : memref<1x121x256xf32, #tpu.memory_space<vmem>>, vector<1x121x256xf32>
    %26 = vector.shape_cast %25 : vector<1x121x256xf32> to vector<121x256xf32>
    %cst_7 = arith.constant dense<0.000000e+00> : vector<12x256xf32>
    %27 = tpu.matmul %24, %26, %cst_7 {dimension_numbers = #tpu.dot_dimension_numbers<[1], [0], [0], [1], [0, 0, 1, 1], [], []>} : vector<12x121xf32>, vector<121x256xf32>, vector<12x256xf32> -> vector<12x256xf32>
    %c0_8 = arith.constant 0 : index
    %c0_9 = arith.constant 0 : index
    %c0_10 = arith.constant 0 : index
    %28 = vector.load %arg6[%c0_8, %c0_9, %c0_10] : memref<1x12x256xf32, #tpu.memory_space<vmem>>, vector<1x12x256xf32>
    %29 = vector.shape_cast %28 : vector<1x12x256xf32> to vector<12x256xf32>
    %30 = vector.shape_cast %27 : vector<12x256xf32> to vector<1x12x256xf32>
    tpu.vector_store %arg6[%c0_8, %c0_9, %c0_10], %30 {strides = array<i32>} : memref<1x12x256xf32, #tpu.memory_space<vmem>>, vector<1x12x256xf32>,
    return
  }
  func.func @transform_0(%arg0: i32, %arg1: i32) -> i32 {
    %c0_i32 = arith.constant 0 : i32
    %c0_i32_0 = arith.constant 0 : i32
    return %c0_i32 : i32
  }
  func.func @transform_1(%arg0: i32, %arg1: i32) -> (i32, i32) {
    %c0_i32 = arith.constant 0 : i32
    %c0_i32_0 = arith.constant 0 : i32
    %c0_i32_1 = arith.constant 0 : i32
    return %c0_i32, %c0_i32_0 : i32, i32
  }
  func.func @transform_2(%arg0: i32, %arg1: i32) -> (i32, i32) {
    %c0_i32 = arith.constant 0 : i32
    %c0_i32_0 = arith.constant 0 : i32
    %c0_i32_1 = arith.constant 0 : i32
    return %c0_i32, %c0_i32_0 : i32, i32
  }
  func.func @transform_3(%arg0: i32, %arg1: i32) -> (i32, i32, i32) {
    %c0_i32 = arith.constant 0 : i32
    %c0_i32_0 = arith.constant 0 : i32
    return %arg0, %c0_i32, %arg1 : i32, i32, i32
  }
  func.func @transform_4(%arg0: i32, %arg1: i32) -> (i32, i32, i32) {
    %c0_i32 = arith.constant 0 : i32
    %c0_i32_0 = arith.constant 0 : i32
    return %arg0, %c0_i32, %arg1 : i32, i32, i32
  }
}

</mosaic_0001>

<llo_original>
// kernel: _lambda_.1
$region0: #{_lambda_.1}
  #allocation0 [shape = 'u32[]', space=smem, size = 0x4, offset = 0x4, fixed_abs, tag = 'smem constant byte address 0x4 - core index']
  #allocation1 [shape = 'u32[144,128]{1,0:T(1,128)}', space=vmem, size = 0x12000, scoped, tag = 'internal scratch']
  %s0 = inlined_call_operand.vmem [shape: f32[5], index: 0, kind: input, shape index: {}]
  %s1 = inlined_call_operand.vmem [shape: f32[12,121], index: 1, kind: input, shape index: {}]
  %s2 = inlined_call_operand.vmem [shape: f32[12,121], index: 2, kind: input, shape index: {}]
  %s3 = inlined_call_operand.vmem [shape: f32[2,121,256], index: 3, kind: input, shape index: {}]
  %s4 = inlined_call_operand.vmem [shape: f32[2,12,256], index: 4, kind: output, shape index: {}]
  %s5 = sld [smem:[#allocation0]]
  $region53: #{_lambda_.1} parent=0
    _
  %s7 = ssub.s32 1, %s5
  %s8 = scalar_select 0, %s7, %s5
  $region1: #{_lambda_.1} parent=0
    #allocation2 [shape = 'u8[512]{0}', space=smem, size = 0x200, scoped, tag = 'input window, operand 0, single buffered']
    #allocation3 [shape = 's32[2]{0}', space=sflag, size = 0x8, scoped, tag = 'scoped memory for _lambda_.1']
    %9 = vsyncpa [#allocation3], 0
    loop: start=0, step=1, limit=4
    $region2: #{_lambda_.1} parent=1 // loop_pre_header
      _
    $region3: #{_lambda_.1} parent=1 // loop_header
      %s11 = sphi 0, %s15
      %p12 = scmp.ge.s32.totalorder %s11, 4
      %s18 = sphi 0, %s30
      %s19 = sphi 0, %s26
      %s20 = sphi 0, %s18
      %s21 = sphi 0, %s19
      %s22 = sphi 0, %s20
      %s23 = sphi 0, %s21
      %s31 = sphi 0, %s31
      %s33 = sphi 0, %s31
      %s34 = sphi 0, %s33
      %s48 = sphi 0, %s34
      %s52 = sphi 0, %s52
      %s54 = sphi 0, %s52
      %s55 = sphi 0, %s54
      %s69 = sphi 0, %s55
      %s73 = sphi 0, %s73
      %s75 = sphi 0, %s73
      %s76 = sphi 0, %s75
      %s90 = sphi 0, %s76
      %s98 = sphi 0, %s100
      %s101 = sphi 0, %s98
      %s102 = sphi 0, %s101
      %s118 = sphi 0, %s102
      %s126 = sphi 0, %s128
      %s129 = sphi 0, %s126
      %s130 = sphi 0, %s129
      %s146 = sphi 0, %s130
    $region4: #{_lambda_.1} parent=1 // loop_header_branch
      %14 = sbr.rel (%p12) target = $region8
    $region5: #{_lambda_.1} parent=1 // loop_body
      %s16 = ssub.s32 %s11, 1
      %s17 = ssub.s32 %s11, 2
      %s24 = sadd.s32 1, %s19
      %p25 = scmp.ge.s32.totalorder %s24, 1
      %s26 = scalar_select %p25, 0, %s24
      %s27 = sadd.s32 1, %s18
      %s28 = scalar_select %p25, %s27, %s18
      %p29 = scmp.ge.s32.totalorder %s28, 2
      %s30 = scalar_select %p29, 0, %s28
      %s32 = sadd.s32 %s31, 1
      %p35 = scmp.eq.s32.totalorder %s11, 1
      %p36 = scmp.ne.s32.totalorder %s31, %s33
      %p37 = scmp.eq.s32.totalorder %s11, 0
      %p38 = por %p36, %p37
      %p39 = scmp.ne.s32.totalorder %s31, %s33
      %p40 = scmp.eq.s32.totalorder %s16, 1
      %p41 = por %p39, %p40
      %p42 = scmp.ne.s32.totalorder %s33, %s34
      %p43 = scmp.eq.s32.totalorder %s16, 0
      %p44 = por %p42, %p43
      %p45 = scmp.ne.s32.totalorder %s33, %s34
      %p46 = scmp.eq.s32.totalorder %s17, 1
      %p47 = por %p45, %p46
      %p49 = scmp.ne.s32.totalorder %s34, %s48
      %p50 = scmp.eq.s32.totalorder %s17, 0
      %p51 = por %p49, %p50
      %s53 = sadd.s32 %s52, 1
      %p56 = scmp.eq.s32.totalorder %s11, 1
      %p57 = scmp.ne.s32.totalorder %s52, %s54
      %p58 = scmp.eq.s32.totalorder %s11, 0
      %p59 = por %p57, %p58
      %p60 = scmp.ne.s32.totalorder %s52, %s54
      %p61 = scmp.eq.s32.totalorder %s16, 1
      %p62 = por %p60, %p61
      %p63 = scmp.ne.s32.totalorder %s54, %s55
      %p64 = scmp.eq.s32.totalorder %s16, 0
      %p65 = por %p63, %p64
      %p66 = scmp.ne.s32.totalorder %s54, %s55
      %p67 = scmp.eq.s32.totalorder %s17, 1
      %p68 = por %p66, %p67
      %p70 = scmp.ne.s32.totalorder %s55, %s69
      %p71 = scmp.eq.s32.totalorder %s17, 0
      %p72 = por %p70, %p71
      %s74 = sadd.s32 %s73, 1
      %p77 = scmp.eq.s32.totalorder %s11, 1
      %p78 = scmp.ne.s32.totalorder %s73, %s75
      %p79 = scmp.eq.s32.totalorder %s11, 0
      %p80 = por %p78, %p79
      %p81 = scmp.ne.s32.totalorder %s73, %s75
      %p82 = scmp.eq.s32.totalorder %s16, 1
      %p83 = por %p81, %p82
      %p84 = scmp.ne.s32.totalorder %s75, %s76
      %p85 = scmp.eq.s32.totalorder %s16, 0
      %p86 = por %p84, %p85
      %p87 = scmp.ne.s32.totalorder %s75, %s76
      %p88 = scmp.eq.s32.totalorder %s17, 1
      %p89 = por %p87, %p88
      %p91 = scmp.ne.s32.totalorder %s76, %s90
      %p92 = scmp.eq.s32.totalorder %s17, 0
      %p93 = por %p91, %p92
      %s94 = ssub.s32 %s18, %s30
      %s95 = ssub.s32 %s19, %s26
      %s96 = sor.u32 %s94, %s95
      %p97 = scmp.eq.s32.totalorder %s96, 0
      %s99 = sadd.s32 %s98, 1
      %s100 = scalar_select %p97, %s98, %s99
      %p103 = pneg %p97
      %p104 = scmp.eq.s32.totalorder %s11, 1
      %p105 = por %p103, %p104
      %p106 = scmp.ne.s32.totalorder %s98, %s101
      %p107 = scmp.eq.s32.totalorder %s11, 0
      %p108 = por %p106, %p107
      %p109 = scmp.ne.s32.totalorder %s98, %s101
      %p110 = scmp.eq.s32.totalorder %s16, 1
      %p111 = por %p109, %p110
      %p112 = scmp.ne.s32.totalorder %s101, %s102
      %p113 = scmp.eq.s32.totalorder %s16, 0
      %p114 = por %p112, %p113
      %p115 = scmp.ne.s32.totalorder %s101, %s102
      %p116 = scmp.eq.s32.totalorder %s17, 1
      %p117 = por %p115, %p116
      %p119 = scmp.ne.s32.totalorder %s102, %s118
      %p120 = scmp.eq.s32.totalorder %s17, 0
      %p121 = por %p119, %p120
      %s122 = ssub.s32 %s18, %s30
      %s123 = ssub.s32 %s19, %s26
      %s124 = sor.u32 %s122, %s123
      %p125 = scmp.eq.s32.totalorder %s124, 0
      %s127 = sadd.s32 %s126, 1
      %s128 = scalar_select %p125, %s126, %s127
      %p131 = pneg %p125
      %p132 = scmp.eq.s32.totalorder %s11, 1
      %p133 = por %p131, %p132
      %p134 = scmp.ne.s32.totalorder %s126, %s129
      %p135 = scmp.eq.s32.totalorder %s11, 0
      %p136 = por %p134, %p135
      %p137 = scmp.ne.s32.totalorder %s126, %s129
      %p138 = scmp.eq.s32.totalorder %s16, 1
      %p139 = por %p137, %p138
      %p140 = scmp.ne.s32.totalorder %s129, %s130
      %p141 = scmp.eq.s32.totalorder %s16, 0
      %p142 = por %p140, %p141
      %p143 = scmp.ne.s32.totalorder %s129, %s130
      %p144 = scmp.eq.s32.totalorder %s17, 1
      %p145 = por %p143, %p144
      %p147 = scmp.ne.s32.totalorder %s130, %s146
      %p148 = scmp.eq.s32.totalorder %s17, 0
      %p149 = por %p147, %p148
      %p150 = scmp.le.s32.totalorder 1, %s11
      %p151 = scmp.lt.s32.totalorder %s11, 3
      %p152 = pnand %p150, %p151
      %p153 = pneg %p152
      // Predicated region
      $region9: #{_lambda_.1} parent=5 // pred_check
        _
      $region10: #{_lambda_.1} parent=5 // pred_check_branch
        %155 = sbr.rel (%p152) target = $region12
      $region11: #{_lambda_.1} parent=5 // pred_region
        %s156 = ssub.s32 %s11, 1
        // Predicated region
        $region13: #{_lambda_.1} parent=11 // pred_check
          %p157 = pneg %p44
        $region14: #{_lambda_.1} parent=11 // pred_check_branch
          %159 = sbr.rel (%p157) target = $region16
        $region15: #{_lambda_.1} parent=11 // pred_region
          %s161 = ssub.s32 16, 16
          %162 = vsyncadd [#allocation3], %s161
          %s164 = sshll.u32 %s0, 4
          %s165 = int_to_ptr.vmem [resolvable:$true] %s164
          %167 = dma.vmem_to_smem %s165, 16, [#allocation2], [#allocation3]
        $region16: #{_lambda_.1} parent=11 // pred_fallthru
          _
        // Predicated region
        $region17: #{_lambda_.1} parent=11 // pred_check
          %p168 = pneg %p65
        $region18: #{_lambda_.1} parent=11 // pred_check_branch
          %170 = sbr.rel (%p168) target = $region20
        $region19: #{_lambda_.1} parent=11 // pred_region
          _
        $region20: #{_lambda_.1} parent=11 // pred_fallthru
          _
        // Predicated region
        $region21: #{_lambda_.1} parent=11 // pred_check
          %p171 = pneg %p86
        $region22: #{_lambda_.1} parent=11 // pred_check_branch
          %173 = sbr.rel (%p171) target = $region24
        $region23: #{_lambda_.1} parent=11 // pred_region
          _
        $region24: #{_lambda_.1} parent=11 // pred_fallthru
          _
      $region12: #{_lambda_.1} parent=5 // pred_fallthru
        _
      %p174 = scmp.lt.s32.totalorder %s11, 2
      // Predicated region
      $region25: #{_lambda_.1} parent=5 // pred_check
        %p175 = pneg %p174
      $region26: #{_lambda_.1} parent=5 // pred_check_branch
        %177 = sbr.rel (%p175) target = $region28
      $region27: #{_lambda_.1} parent=5 // pred_region
        // Predicated region
        $region29: #{_lambda_.1} parent=27 // pred_check
          %p178 = pneg %p108
        $region30: #{_lambda_.1} parent=27 // pred_check_branch
          %180 = sbr.rel (%p178) target = $region32
        $region31: #{_lambda_.1} parent=27 // pred_region
          %s181 = smul.u32 2, %s19
          %p182 = scmp.lt.s32.totalorder %s18, 1
          %s183 = scalar_select %p182, %s18, 1
          %p184 = scmp.lt.s32.totalorder %s181, 1
          %s185 = scalar_select %p184, %s181, 1
          %s186 = smul.addr %s183, 32
          %s187 = sadd.s32 %s185, %s186
          %s188 = smul.addr %s187, 8
          %s189 = scalar_lea.vmem %s3, %s188
          %s190 = smul.u32 2, %s19
        $region32: #{_lambda_.1} parent=27 // pred_fallthru
          _
      $region28: #{_lambda_.1} parent=5 // pred_fallthru
        _
      %p191 = scmp.le.s32.totalorder 1, %s11
      %p192 = scmp.lt.s32.totalorder %s11, 3
      %p193 = pnand %p191, %p192
      %p194 = pneg %p193
      // Predicated region
      $region33: #{_lambda_.1} parent=5 // pred_check
        _
      $region34: #{_lambda_.1} parent=5 // pred_check_branch
        %196 = sbr.rel (%p193) target = $region36
      $region35: #{_lambda_.1} parent=5 // pred_region
        %s197 = ssub.s32 %s11, 1
        // Predicated region
        $region37: #{_lambda_.1} parent=35 // pred_check
          %p198 = pneg %p44
        $region38: #{_lambda_.1} parent=35 // pred_check_branch
          %200 = sbr.rel (%p198) target = $region40
        $region39: #{_lambda_.1} parent=35 // pred_region
          %201 = dma.done [#allocation3], 16
        $region40: #{_lambda_.1} parent=35 // pred_fallthru
          _
        %202 = sfence
        %p203 = pneg %p44
        %p204 = pneg %p41
        %p205 = pneg %p65
        %p206 = pneg %p62
        %p207 = pneg %p86
        %p208 = pneg %p83
        %s209 = smul.u32 2, %s21
        %p210 = scmp.lt.s32.totalorder %s20, 1
        %s211 = scalar_select %p210, %s20, 1
        %p212 = scmp.lt.s32.totalorder %s209, 1
        %s213 = scalar_select %p212, %s209, 1
        %s214 = smul.addr %s211, 32
        %s215 = sadd.s32 %s213, %s214
        %s216 = smul.addr %s215, 8
        %s217 = scalar_lea.vmem %s3, %s216
        %p218 = pneg %p114
        %p219 = pneg %p111
        %p220 = pneg %p142
        %p221 = pneg %p139
        %s222 = smul.u32 2, %s21
        %p223 = scmp.lt.s32.totalorder %s20, 1
        %s224 = scalar_select %p223, %s20, 1
        %p225 = scmp.lt.s32.totalorder %s222, 1
        %s226 = scalar_select %p225, %s222, 1
        %s227 = smul.addr %s224, 4
        %s228 = sadd.s32 %s226, %s227
        %s229 = smul.addr %s228, 8
        %s230 = scalar_lea.vmem %s4, %s229
        %s231 = smul.u32 2, %s21
        %p232 = scmp.lt.s32.totalorder %s20, 1
        %s233 = scalar_select %p232, %s20, 1
        %p234 = scmp.lt.s32.totalorder %s231, 1
        %s235 = scalar_select %p234, %s231, 1
        %s236 = smul.addr %s233, 32
        %s237 = sadd.s32 %s235, %s236
        %s238 = smul.addr %s237, 8
        %s239 = scalar_lea.vmem %s3, %s238
        %s240 = smul.u32 2, %s21
        %s241 = smul.u32 2, %s21
        %p242 = scmp.lt.s32.totalorder %s20, 1
        %s243 = scalar_select %p242, %s20, 1
        %p244 = scmp.lt.s32.totalorder %s241, 1
        %s245 = scalar_select %p244, %s241, 1
        %s246 = smul.addr %s243, 4
        %s247 = sadd.s32 %s245, %s246
        %s248 = smul.addr %s247, 8
        %s249 = scalar_lea.vmem %s4, %s248
        %s250 = smul.u32 2, %s21
        %s251 = sld [smem:[#allocation2]]
        %s252 = sld [smem:[#allocation2 + $0x1]]
        %s253 = sld [smem:[#allocation2 + $0x2]]
        %s254 = sld [smem:[#allocation2 + $0x3]]
        %s255 = sld [smem:[#allocation2 + $0x4]]
        %v256 = vld [vmem:[%s1] sm:$0xff]
        %v257 = vld [vmem:[%s1 + $0x8] sm:$0xf]
        %v258 = vld [vmem:[%s2] sm:$0xff]
        %v259 = vld [vmem:[%s2 + $0x8] sm:$0xf]
        %v260 = vmul.f32 %v256, %v256
        %v261 = vmul.f32 %v257, %v257
        %v262 = vstv %s251
        %v263 = vmul.f32 %v262, %v260
        %v264 = vmul.f32 %v262, %v261
        %v265 = vadd.f32 %v258, %v263
        %v266 = vadd.f32 %v259, %v264
        %v267 = vmul.f32 %v265, %v265
        %v268 = vmul.f32 %v266, %v266
        %v269 = vsub.f32 0.0, %v260
        %v270 = vsub.f32 0.0, %v261
        %v271 = vstv %s252
        %v272 = vmul.f32 %v269, %v271
        %v273 = vmul.f32 %v270, %v271
        %v274 = vstv %s253
        %v275 = vmul.f32 %v267, %v274
        %v276 = vmul.f32 %v268, %v274
        %v277 = vsub.f32 %v272, %v275
        %v278 = vsub.f32 %v273, %v276
        %v279 = vmul.f32 %v277, 1.442695
        %v280 = vpow.pop %v279
        %v281 = vmul.f32 %v278, 1.442695
        %v282 = vpow.pop %v281
        %v283 = vstv %s255
        %v284 = vmul.f32 %v267, %v283
        %v285 = vmul.f32 %v268, %v283
        %v286 = vstv %s254
        %v287 = vsub.f32 %v284, %v286
        %v288 = vsub.f32 %v285, %v286
        %v289 = vmul.f32 %v280, %v287
        %v290 = vmul.f32 %v282, %v288
        %v291 = vld [vmem:[%s239] sm:$0xff]
        %v292 = vld [vmem:[%s239 + $0x8] sm:$0xff]
        %v293 = vld [vmem:[%s239 + $0x10] sm:$0xff]
        %v294 = vld [vmem:[%s239 + $0x18] sm:$0xff]
        %v295 = vld [vmem:[%s239 + $0x20] sm:$0xff]
        %v296 = vld [vmem:[%s239 + $0x28] sm:$0xff]
        %v297 = vld [vmem:[%s239 + $0x30] sm:$0xff]
        %v298 = vld [vmem:[%s239 + $0x38] sm:$0xff]
        %v299 = vld [vmem:[%s239 + $0x40] sm:$0xff]
        %v300 = vld [vmem:[%s239 + $0x48] sm:$0xff]
        %v301 = vld [vmem:[%s239 + $0x50] sm:$0xff]
        %v302 = vld [vmem:[%s239 + $0x58] sm:$0xff]
        %v303 = vld [vmem:[%s239 + $0x60] sm:$0xff]
        %v304 = vld [vmem:[%s239 + $0x68] sm:$0xff]
        %v305 = vld [vmem:[%s239 + $0x70] sm:$0xff]
        %v306 = vld [vmem:[%s239 + $0x78] sm:$0xff]
        %v307 = vld [vmem:[%s239 + $0x80] sm:$0xff]
        %v308 = vld [vmem:[%s239 + $0x88] sm:$0xff]
        %v309 = vld [vmem:[%s239 + $0x90] sm:$0xff]
        %v310 = vld [vmem:[%s239 + $0x98] sm:$0xff]
        %v311 = vld [vmem:[%s239 + $0xa0] sm:$0xff]
        %v312 = vld [vmem:[%s239 + $0xa8] sm:$0xff]
        %v313 = vld [vmem:[%s239 + $0xb0] sm:$0xff]
        %v314 = vld [vmem:[%s239 + $0xb8] sm:$0xff]
        %v315 = vld [vmem:[%s239 + $0xc0] sm:$0xff]
        %v316 = vld [vmem:[%s239 + $0xc8] sm:$0xff]
        %v317 = vld [vmem:[%s239 + $0xd0] sm:$0xff]
        %v318 = vld [vmem:[%s239 + $0xd8] sm:$0xff]
        %v319 = vld [vmem:[%s239 + $0xe0] sm:$0xff]
        %v320 = vld [vmem:[%s239 + $0xe8] sm:$0xff]
        %v321 = vld [vmem:[%s239 + $0xf0] sm:$0x1]
        %v322 = vld [vmem:[%s239 + $0xf8] sm:$0x1]
        %vm323 = vcmask 990208
        %v325 = vsel %vm323, %v289, 0
        %v328 = vsel %vm323, %v290, 0
        %vm330 = vcmask 1040384
        %v332 = vsel %vm330, %v321, 0
        %v335 = vsel %vm330, %v322, 0
        %337 = vmatprep.subr.mxu0 %v292
        %338 = vmatpush1.msra.mxu0 %v291
        %339 = vmatprep.subr.mxu0 %v294
        %340 = vmatpush1.msra.mxu0 %v293
        %341 = vmatprep.subr.mxu0 %v296
        %342 = vmatpush1.msra.mxu0 %v295
        %343 = vmatprep.subr.mxu0 %v298
        %344 = vmatpush1.msra.mxu0 %v297
        %345 = vmatprep.subr.mxu0 %v300
        %346 = vmatpush1.msra.mxu0 %v299
        %347 = vmatprep.subr.mxu0 %v302
        %348 = vmatpush1.msra.mxu0 %v301
        %349 = vmatprep.subr.mxu0 %v304
        %350 = vmatpush1.msra.mxu0 %v303
        %351 = vmatprep.subr.mxu0 %v306
        %352 = vmatpush1.msra.mxu0 %v305
        %353 = vmatprep.subr.mxu0 %v308
        %354 = vmatpush1.msra.mxu0 %v307
        %355 = vmatprep.subr.mxu0 %v310
        %356 = vmatpush1.msra.mxu0 %v309
        %357 = vmatprep.subr.mxu0 %v312
        %358 = vmatpush1.msra.mxu0 %v311
        %359 = vmatprep.subr.mxu0 %v314
        %360 = vmatpush1.msra.mxu0 %v313
        %361 = vmatprep.subr.mxu0 %v316
        %362 = vmatpush1.msra.mxu0 %v315
        %363 = vmatprep.subr.mxu0 %v318
        %364 = vmatpush1.msra.mxu0 %v317
        %365 = vmatprep.subr.mxu0 %v320
        %366 = vmatpush1.msra.mxu0 %v319
        %367 = vmatprep.subr.mxu0 %v335
        %368 = vmatpush1.msra.mxu0 %v332
        %369 = vmatprep.subr.mxu0 0.0
        %370 = vmatpush1.msra.mxu0 0.0
        %371 = vmatprep.subr.mxu0 0.0
        %372 = vmatpush1.msra.mxu0 0.0
        %373 = vmatprep.subr.mxu0 0.0
        %374 = vmatpush1.msra.mxu0 0.0
        %375 = vmatprep.subr.mxu0 0.0
        %376 = vmatpush1.msra.mxu0 0.0
        %377 = vmatprep.subr.mxu0 0.0
        %378 = vmatpush1.msra.mxu0 0.0
        %379 = vmatprep.subr.mxu0 0.0
        %380 = vmatpush1.msra.mxu0 0.0
        %381 = vmatprep.subr.mxu0 0.0
        %382 = vmatpush1.msra.mxu0 0.0
        %383 = vmatprep.subr.mxu0 0.0
        %384 = vmatpush1.msra.mxu0 0.0
        %385 = vmatprep.subr.mxu0 0.0
        %386 = vmatpush1.msra.mxu0 0.0
        %387 = vmatprep.subr.mxu0 0.0
        %388 = vmatpush1.msra.mxu0 0.0
        %389 = vmatprep.subr.mxu0 0.0
        %390 = vmatpush1.msra.mxu0 0.0
        %391 = vmatprep.subr.mxu0 0.0
        %392 = vmatpush1.msra.mxu0 0.0
        %393 = vmatprep.subr.mxu0 0.0
        %394 = vmatpush1.msra.mxu0 0.0
        %395 = vmatprep.subr.mxu0 0.0
        %396 = vmatpush1.msra.mxu0 0.0
        %397 = vmatprep.subr.mxu0 0.0
        %398 = vmatpush1.msra.mxu0 0.0
        %399 = vmatprep.subr.mxu0 0.0
        %400 = vmatpush1.msra.mxu0 0.0
        %401 = vmatprep.mubr.f32.mxu0 0.0
        %402 = vmatmul.mubr.f32.gmra.mrb[0].mxu0 %v325
        %v403 = vpop.f32.mrb[0].mxu0
        %v404 = vadd.f32 0.0, %v403
        %v405 = vpop.f32.mrb[0].mxu0
        %v406 = vadd.f32 0.0, %v405
        %407 = vmatprep.mubr.f32.mxu0 0.0
        %408 = vmatmul.mubr.f32.gmra.mrb[0].mxu0 %v328
        %v409 = vpop.f32.mrb[0].mxu0
        %v410 = vadd.f32 0.0, %v409
        %v411 = vpop.f32.mrb[0].mxu0
        %v412 = vadd.f32 0.0, %v411
        %413 = vdwg.mxu0
        %414 = vst [vmem:[%s249] sm:$0xff] %v404
        %415 = vst [vmem:[%s249 + $0x8] sm:$0xff] %v406
        %416 = vst [vmem:[%s249 + $0x10] sm:$0xf] %v410
        %417 = vst [vmem:[%s249 + $0x18] sm:$0xf] %v412
        %s418 = smul.u32 2, %s21
        %p419 = scmp.lt.s32.totalorder %s20, 1
        %s420 = scalar_select %p419, %s20, 1
        %p421 = scmp.lt.s32.totalorder %s418, 1
        %s422 = scalar_select %p421, %s418, 1
        %s423 = smul.addr %s420, 4
        %s424 = sadd.s32 %s422, %s423
        %s425 = smul.addr %s424, 8
        %s426 = scalar_lea.vmem %s4, %s425
        // Predicated region
        $region41: #{_lambda_.1} parent=35 // pred_check
          %p427 = pneg %p139
        $region42: #{_lambda_.1} parent=35 // pred_check_branch
          %429 = sbr.rel (%p427) target = $region44
        $region43: #{_lambda_.1} parent=35 // pred_region
          %s430 = smul.u32 2, %s21
        $region44: #{_lambda_.1} parent=35 // pred_fallthru
          _
      $region36: #{_lambda_.1} parent=5 // pred_fallthru
        _
      %p431 = scmp.le.s32.totalorder 2, %s11
      // Predicated region
      $region45: #{_lambda_.1} parent=5 // pred_check
        %p432 = pneg %p431
      $region46: #{_lambda_.1} parent=5 // pred_check_branch
        %434 = sbr.rel (%p432) target = $region48
      $region47: #{_lambda_.1} parent=5 // pred_region
        %s435 = ssub.s32 %s11, 2
        // Predicated region
        $region49: #{_lambda_.1} parent=47 // pred_check
          %p436 = pneg %p145
        $region50: #{_lambda_.1} parent=47 // pred_check_branch
          %438 = sbr.rel (%p436) target = $region52
        $region51: #{_lambda_.1} parent=47 // pred_region
          %s439 = smul.u32 2, %s23
          %p440 = scmp.lt.s32.totalorder %s22, 1
          %s441 = scalar_select %p440, %s22, 1
          %p442 = scmp.lt.s32.totalorder %s439, 1
          %s443 = scalar_select %p442, %s439, 1
          %s444 = smul.addr %s441, 4
          %s445 = sadd.s32 %s443, %s444
          %s446 = smul.addr %s445, 8
          %s447 = scalar_lea.vmem %s4, %s446
        $region52: #{_lambda_.1} parent=47 // pred_fallthru
          _
      $region48: #{_lambda_.1} parent=5 // pred_fallthru
        _
    $region6: #{_lambda_.1} parent=1 // loop_footer
      %s15 = sadd.s32 1, %s11
    $region7: #{_lambda_.1} parent=1 // loop_footer_branch
      %10 = sbr.rel target = $region3
    $region8: #{_lambda_.1} parent=1 // loop_exit
      _
    %448 = vsyncpa [#allocation3], 1
    %s449 = scalar_lea.sflag [#allocation3], 1
    %450 = vsyncpa %s449, 1

</llo_original>
